<compile_context>
chip_gen: v5e
topology: v5e:2x2
jax: 0.10.0
libtpu: 0.0.40
codegen_flags: <defaults>
</compile_context>

<pallas_src>
import functools
import math

import jax
import jax.numpy as jnp
from jax import lax
from jax.experimental import pallas as pl
from jax.experimental.pallas import tpu as pltpu


def _round_up(x: int, m: int) -> int:
    return (x + m - 1) // m * m


# v7x has only 64 MiB physical VMEM per TensorCore; keep the resident-table
# fast path comfortably below that so the same dispatch is safe on all gens.
_FAST_PATH_MAX_TABLE_BYTES = 24 * 1024 * 1024
# Bound the SMEM footprint of the scalar-prefetched ids (1-D SMEM pads to
# next_pow2(4N) bytes); longer sequences are split across pallas_calls.
_MAX_TOKENS_PER_CALL = 32768
_DEFAULT_CHUNK = 64  # tokens per grid step (multiple of 8 sublanes for f32)


# --------------------------------------------------------------------------- #
# Kernels
# --------------------------------------------------------------------------- #
def _resident_gather_kernel(ids_ref, table_ref, out_ref, *, chunk, scale):
    """Fast path: table fully VMEM-resident, gather rows with in-VMEM reads.

    ids_ref:   SMEM (n_tok,) int32 (scalar-prefetched token ids)
    table_ref: VMEM (vocab, dim_pad) — resident across the whole grid
    out_ref:   VMEM (chunk, dim_pad) — dense output block for this chunk
    """
    base = pl.program_id(0) * chunk

    def body(t, carry):
        row = ids_ref[base + t]                       # scalar id from SMEM
        out_ref[pl.ds(t, 1), :] = (
            table_ref[pl.ds(row, 1), :] * scale
        ).astype(out_ref.dtype)
        return carry

    lax.fori_loop(0, chunk, body, 0, unroll=True)


def _hbm_gather_kernel(ids_ref, table_hbm, out_ref, rows_vmem, sems, *, chunk, scale):
    """Large-vocab path: manual DMA gather of `chunk` rows from the HBM table.

    ids_ref:   SMEM (n_tok,) int32
    table_hbm: HBM (vocab, dim_pad) — memory_space=pl.ANY, no auto-DMA
    out_ref:   VMEM (chunk, dim_pad)
    rows_vmem: VMEM (chunk, dim_pad) scratch gather buffer
    sems:      DMA semaphore array (chunk,)
    """
    base = pl.program_id(0) * chunk

    # Issue all row DMAs first so many 2-4 KB fetches are in flight at once
    # (a single small DMA cannot cover HBM latency).
    def issue(t, carry):
        row = ids_ref[base + t]
        pltpu.make_async_copy(
            table_hbm.at[pl.ds(row, 1), :],
            rows_vmem.at[pl.ds(t, 1), :],
            sems.at[t],
        ).start()
        return carry

    lax.fori_loop(0, chunk, issue, 0, unroll=True)

    # Drain: wait for every row fetch.
    def drain(t, carry):
        row = ids_ref[base + t]
        pltpu.make_async_copy(
            table_hbm.at[pl.ds(row, 1), :],
            rows_vmem.at[pl.ds(t, 1), :],
            sems.at[t],
        ).wait()
        return carry

    lax.fori_loop(0, chunk, drain, 0, unroll=True)

    # One dense, lane+sublane-aligned store for the whole chunk, scale fused in.
    out_ref[...] = (rows_vmem[...] * scale).astype(out_ref.dtype)


# --------------------------------------------------------------------------- #
# Module wrapper
# --------------------------------------------------------------------------- #
class Embeddings:
    """Pallas port of the PyTorch `Embeddings` module (lookup * sqrt(dim_embed))."""

    def __init__(self, table: jax.Array):
        vocab_size, dim_embed = table.shape
        self.vocab_size = int(vocab_size)
        self.dim_embed = int(dim_embed)
        self.scale = float(math.sqrt(dim_embed))

        # Pad the embedding dim to a lane-dense multiple of 128 ONCE at init
        # (doing this per-forward would re-materialize the full table in HBM).
        self.dim_pad = _round_up(self.dim_embed, 128)
        if self.dim_pad != self.dim_embed:
            table = jnp.pad(table, ((0, 0), (0, self.dim_pad - self.dim_embed)))
        self.table = table
        self.table_bytes = self.vocab_size * self.dim_pad * table.dtype.itemsize
        self.use_resident = self.table_bytes <= _FAST_PATH_MAX_TABLE_BYTES

    # -- per-pallas_call helpers -------------------------------------------- #
    def _resident_call(self, ids_piece: jax.Array, chunk: int) -> jax.Array:
        n_tok = ids_piece.shape[0]
        vocab, dim_pad = self.table.shape
        out_block_bytes = chunk * dim_pad * self.table.dtype.itemsize
        # Table + double-buffered output block + headroom.  Also raises v5e's
        # 16 MiB scoped-VMEM default when the resident table needs it.
        vmem_limit = int(max(self.table_bytes + 2 * out_block_bytes + (1 << 20),
                             32 * 1024 * 1024))
        kernel = functools.partial(
            _resident_gather_kernel, chunk=chunk, scale=self.scale)
        return pl.pallas_call(
            kernel,
            out_shape=jax.ShapeDtypeStruct((n_tok, dim_pad), self.table.dtype),
            grid_spec=pltpu.PrefetchScalarGridSpec(
                num_scalar_prefetch=1,            # ids -> SMEM
                grid=(n_tok // chunk,),
                in_specs=[
                    # Constant block index => table DMA'd once, stays resident.
                    pl.BlockSpec((vocab, dim_pad), lambda i, ids: (0, 0)),
                ],
                out_specs=pl.BlockSpec((chunk, dim_pad), lambda i, ids: (i, 0)),
            ),
            compiler_params=pltpu.CompilerParams(
                dimension_semantics=("parallel",),
                vmem_limit_bytes=vmem_limit,
            ),
        )(ids_piece, self.table)

    def _hbm_gather_call(self, ids_piece: jax.Array, chunk: int) -> jax.Array:
        n_tok = ids_piece.shape[0]
        vocab, dim_pad = self.table.shape
        kernel = functools.partial(
            _hbm_gather_kernel, chunk=chunk, scale=self.scale)
        return pl.pallas_call(
            kernel,
            out_shape=jax.ShapeDtypeStruct((n_tok, dim_pad), self.table.dtype),
            grid_spec=pltpu.PrefetchScalarGridSpec(
                num_scalar_prefetch=1,            # ids -> SMEM
                grid=(n_tok // chunk,),
                in_specs=[
                    pl.BlockSpec(memory_space=pl.ANY),   # table stays in HBM
                ],
                out_specs=pl.BlockSpec((chunk, dim_pad), lambda i, ids: (i, 0)),
                scratch_shapes=[
                    pltpu.VMEM((chunk, dim_pad), self.table.dtype),
                    pltpu.SemaphoreType.DMA((chunk,)),
                ],
            ),
            compiler_params=pltpu.CompilerParams(
                dimension_semantics=("parallel",),
            ),
        )(ids_piece, self.table)

    # -- forward -------------------------------------------------------------- #
    def __call__(self, ids: jax.Array, *, force_dma_gather: bool = False) -> jax.Array:
        orig_shape = ids.shape
        n_tok = int(math.prod(orig_shape))

        # TODO(synk): PyTorch nn.Embedding raises on out-of-range ids; there is
        # no clean in-kernel raise in Pallas, so clamp instead (bad ids are
        # silently mapped to row 0 / vocab-1).
        ids_flat = jnp.clip(
            ids.astype(jnp.int32).reshape(n_tok), 0, self.vocab_size - 1)

        # Chunk of T tokens per grid step (multiple of 8 sublanes for f32).
        chunk = min(_DEFAULT_CHUNK, _round_up(max(n_tok, 8), 8))
        n_pad = _round_up(max(n_tok, chunk), chunk)
        if n_pad != n_tok:
            ids_flat = jnp.pad(ids_flat, (0, n_pad - n_tok))

        use_resident = self.use_resident and not force_dma_gather

        # Wrapper-level token chunking bounds the prefetched-ids SMEM footprint
        # for very long sequences (1-D SMEM pads to next_pow2(4N) bytes).
        pieces = []
        for start in range(0, n_pad, _MAX_TOKENS_PER_CALL):
            stop = min(start + _MAX_TOKENS_PER_CALL, n_pad)
            piece = ids_flat[start:stop]
            if use_resident:
                pieces.append(self._resident_call(piece, chunk))
            else:
                pieces.append(self._hbm_gather_call(piece, chunk))
        out = pieces[0] if len(pieces) == 1 else jnp.concatenate(pieces, axis=0)

        out = out[:n_tok, : self.dim_embed]
        return out.reshape(*orig_shape, self.dim_embed)


# --------------------------------------------------------------------------- #
# Demo / correctness check
# --------------------------------------------------------------------------- #
if __name__ == "__main__":
    vocab_size = 64
    dim_embed = 32
    B, S = 2, 8

    key = jax.random.PRNGKey(0)
    k_ids, k_table = jax.random.split(key)

    # Deterministic "parameters" (nn.Embedding default init is N(0, 1)).
    table = jax.random.normal(k_table, (vocab_size, dim_embed), dtype=jnp.float32)
    ids = jax.random.randint(k_ids, (B, S), 0, vocab_size, dtype=jnp.int32)

    emb = Embeddings(table)
    ref = jnp.take(table, ids, axis=0) * jnp.float32(math.sqrt(dim_embed))

    # Path 1: resident-table fast path (natural dispatch for this small vocab).
    out_fast = jax.block_until_ready(emb(ids))
    assert out_fast.shape == (B, S, dim_embed)
    assert jnp.allclose(out_fast, ref, atol=1e-5, rtol=1e-5)

    # Path 2: large-vocab HBM manual-DMA gather path (forced here for coverage).
    out_gather = jax.block_until_ready(emb(ids, force_dma_gather=True))
    assert out_gather.shape == (B, S, dim_embed)
    assert jnp.allclose(out_gather, ref, atol=1e-5, rtol=1e-5)

    print("KERNEL_OK")
</pallas_src>

<mosaic_0001>
module attributes {stable_mosaic.version = 11 : i64} {
  func.func @_resident_gather_kernel(%arg0: i32, %arg1: memref<16xi32, #tpu.memory_space<smem>>, %arg2: memref<64x128xf32, #tpu.memory_space<vmem>>, %arg3: memref<16x128xf32, #tpu.memory_space<vmem>>) attributes {dimension_semantics = [#tpu.dimension_semantics<parallel>], iteration_bounds = array<i64: 1>, scalar_prefetch = 1 : i64, scratch_operands = 0 : i64, tpu.core_type = #tpu.core_type<tc>, window_params = [{pipeline_mode = #tpu.pipeline_mode<synchronous>, transform_indices = @transform_0, window_bounds = array<i64: 64, 128>}, {transform_indices = @transform_1, window_bounds = array<i64: 16, 128>}]} {
    %c16_i32 = arith.constant 16 : i32
    %0 = arith.muli %arg0, %c16_i32 : i32
    %c0_i32 = arith.constant 0 : i32
    %1 = arith.addi %0, %c0_i32 : i32
    %2 = arith.index_cast %1 : i32 to index
    %3 = memref.load %arg1[%2] : memref<16xi32, #tpu.memory_space<smem>>
    %4 = arith.index_cast %3 : i32 to index
    %c0 = arith.constant 0 : index
    %5 = vector.load %arg2[%4, %c0] : memref<64x128xf32, #tpu.memory_space<vmem>>, vector<1x128xf32>
    %cst = arith.constant 5.65685415 : f32
    %6 = vector.broadcast %cst : f32 to vector<1x128xf32>
    %7 = arith.mulf %5, %6 : vector<1x128xf32>
    %8 = arith.index_cast %c0_i32 : i32 to index
    %c0_0 = arith.constant 0 : index
    %9 = vector.load %arg3[%8, %c0_0] : memref<16x128xf32, #tpu.memory_space<vmem>>, vector<1x128xf32>
    tpu.vector_store %arg3[%8, %c0_0], %7 {strides = array<i32>} : memref<16x128xf32, #tpu.memory_space<vmem>>, vector<1x128xf32>,
    %c1_i32 = arith.constant 1 : i32
    %10 = arith.addi %0, %c1_i32 : i32
    %11 = arith.index_cast %10 : i32 to index
    %12 = memref.load %arg1[%11] : memref<16xi32, #tpu.memory_space<smem>>
    %13 = arith.index_cast %12 : i32 to index
    %c0_1 = arith.constant 0 : index
    %14 = vector.load %arg2[%13, %c0_1] : memref<64x128xf32, #tpu.memory_space<vmem>>, vector<1x128xf32>
    %cst_2 = arith.constant 5.65685415 : f32
    %15 = vector.broadcast %cst_2 : f32 to vector<1x128xf32>
    %16 = arith.mulf %14, %15 : vector<1x128xf32>
    %17 = arith.index_cast %c1_i32 : i32 to index
    %c0_3 = arith.constant 0 : index
    %18 = vector.load %arg3[%17, %c0_3] : memref<16x128xf32, #tpu.memory_space<vmem>>, vector<1x128xf32>
    tpu.vector_store %arg3[%17, %c0_3], %16 {strides = array<i32>} : memref<16x128xf32, #tpu.memory_space<vmem>>, vector<1x128xf32>,
    %c2_i32 = arith.constant 2 : i32
    %19 = arith.addi %0, %c2_i32 : i32
    %20 = arith.index_cast %19 : i32 to index
    %21 = memref.load %arg1[%20] : memref<16xi32, #tpu.memory_space<smem>>
    %22 = arith.index_cast %21 : i32 to index
    %c0_4 = arith.constant 0 : index
    %23 = vector.load %arg2[%22, %c0_4] : memref<64x128xf32, #tpu.memory_space<vmem>>, vector<1x128xf32>
    %cst_5 = arith.constant 5.65685415 : f32
    %24 = vector.broadcast %cst_5 : f32 to vector<1x128xf32>
    %25 = arith.mulf %23, %24 : vector<1x128xf32>
    %26 = arith.index_cast %c2_i32 : i32 to index
    %c0_6 = arith.constant 0 : index
    %27 = vector.load %arg3[%26, %c0_6] : memref<16x128xf32, #tpu.memory_space<vmem>>, vector<1x128xf32>
    tpu.vector_store %arg3[%26, %c0_6], %25 {strides = array<i32>} : memref<16x128xf32, #tpu.memory_space<vmem>>, vector<1x128xf32>,
    %c3_i32 = arith.constant 3 : i32
    %28 = arith.addi %0, %c3_i32 : i32
    %29 = arith.index_cast %28 : i32 to index
    %30 = memref.load %arg1[%29] : memref<16xi32, #tpu.memory_space<smem>>
    %31 = arith.index_cast %30 : i32 to index
    %c0_7 = arith.constant 0 : index
    %32 = vector.load %arg2[%31, %c0_7] : memref<64x128xf32, #tpu.memory_space<vmem>>, vector<1x128xf32>
    %cst_8 = arith.constant 5.65685415 : f32
    %33 = vector.broadcast %cst_8 : f32 to vector<1x128xf32>
    %34 = arith.mulf %32, %33 : vector<1x128xf32>
    %35 = arith.index_cast %c3_i32 : i32 to index
    %c0_9 = arith.constant 0 : index
    %36 = vector.load %arg3[%35, %c0_9] : memref<16x128xf32, #tpu.memory_space<vmem>>, vector<1x128xf32>
    tpu.vector_store %arg3[%35, %c0_9], %34 {strides = array<i32>} : memref<16x128xf32, #tpu.memory_space<vmem>>, vector<1x128xf32>,
    %c4_i32 = arith.constant 4 : i32
    %37 = arith.addi %0, %c4_i32 : i32
    %38 = arith.index_cast %37 : i32 to index
    %39 = memref.load %arg1[%38] : memref<16xi32, #tpu.memory_space<smem>>
    %40 = arith.index_cast %39 : i32 to index
    %c0_10 = arith.constant 0 : index
    %41 = vector.load %arg2[%40, %c0_10] : memref<64x128xf32, #tpu.memory_space<vmem>>, vector<1x128xf32>
    %cst_11 = arith.constant 5.65685415 : f32
    %42 = vector.broadcast %cst_11 : f32 to vector<1x128xf32>
    %43 = arith.mulf %41, %42 : vector<1x128xf32>
    %44 = arith.index_cast %c4_i32 : i32 to index
    %c0_12 = arith.constant 0 : index
    %45 = vector.load %arg3[%44, %c0_12] : memref<16x128xf32, #tpu.memory_space<vmem>>, vector<1x128xf32>
    tpu.vector_store %arg3[%44, %c0_12], %43 {strides = array<i32>} : memref<16x128xf32, #tpu.memory_space<vmem>>, vector<1x128xf32>,
    %c5_i32 = arith.constant 5 : i32
    %46 = arith.addi %0, %c5_i32 : i32
    %47 = arith.index_cast %46 : i32 to index
    %48 = memref.load %arg1[%47] : memref<16xi32, #tpu.memory_space<smem>>
    %49 = arith.index_cast %48 : i32 to index
    %c0_13 = arith.constant 0 : index
    %50 = vector.load %arg2[%49, %c0_13] : memref<64x128xf32, #tpu.memory_space<vmem>>, vector<1x128xf32>
    %cst_14 = arith.constant 5.65685415 : f32
    %51 = vector.broadcast %cst_14 : f32 to vector<1x128xf32>
    %52 = arith.mulf %50, %51 : vector<1x128xf32>
    %53 = arith.index_cast %c5_i32 : i32 to index
    %c0_15 = arith.constant 0 : index
    %54 = vector.load %arg3[%53, %c0_15] : memref<16x128xf32, #tpu.memory_space<vmem>>, vector<1x128xf32>
    tpu.vector_store %arg3[%53, %c0_15], %52 {strides = array<i32>} : memref<16x128xf32, #tpu.memory_space<vmem>>, vector<1x128xf32>,
    %c6_i32 = arith.constant 6 : i32
    %55 = arith.addi %0, %c6_i32 : i32
    %56 = arith.index_cast %55 : i32 to index
    %57 = memref.load %arg1[%56] : memref<16xi32, #tpu.memory_space<smem>>
    %58 = arith.index_cast %57 : i32 to index
    %c0_16 = arith.constant 0 : index
    %59 = vector.load %arg2[%58, %c0_16] : memref<64x128xf32, #tpu.memory_space<vmem>>, vector<1x128xf32>
    %cst_17 = arith.constant 5.65685415 : f32
    %60 = vector.broadcast %cst_17 : f32 to vector<1x128xf32>
    %61 = arith.mulf %59, %60 : vector<1x128xf32>
    %62 = arith.index_cast %c6_i32 : i32 to index
    %c0_18 = arith.constant 0 : index
    %63 = vector.load %arg3[%62, %c0_18] : memref<16x128xf32, #tpu.memory_space<vmem>>, vector<1x128xf32>
    tpu.vector_store %arg3[%62, %c0_18], %61 {strides = array<i32>} : memref<16x128xf32, #tpu.memory_space<vmem>>, vector<1x128xf32>,
    %c7_i32 = arith.constant 7 : i32
    %64 = arith.addi %0, %c7_i32 : i32
    %65 = arith.index_cast %64 : i32 to index
    %66 = memref.load %arg1[%65] : memref<16xi32, #tpu.memory_space<smem>>
    %67 = arith.index_cast %66 : i32 to index
    %c0_19 = arith.constant 0 : index
    %68 = vector.load %arg2[%67, %c0_19] : memref<64x128xf32, #tpu.memory_space<vmem>>, vector<1x128xf32>
    %cst_20 = arith.constant 5.65685415 : f32
    %69 = vector.broadcast %cst_20 : f32 to vector<1x128xf32>
    %70 = arith.mulf %68, %69 : vector<1x128xf32>
    %71 = arith.index_cast %c7_i32 : i32 to index
    %c0_21 = arith.constant 0 : index
    %72 = vector.load %arg3[%71, %c0_21] : memref<16x128xf32, #tpu.memory_space<vmem>>, vector<1x128xf32>
    tpu.vector_store %arg3[%71, %c0_21], %70 {strides = array<i32>} : memref<16x128xf32, #tpu.memory_space<vmem>>, vector<1x128xf32>,
    %c8_i32 = arith.constant 8 : i32
    %73 = arith.addi %0, %c8_i32 : i32
    %74 = arith.index_cast %73 : i32 to index
    %75 = memref.load %arg1[%74] : memref<16xi32, #tpu.memory_space<smem>>
    %76 = arith.index_cast %75 : i32 to index
    %c0_22 = arith.constant 0 : index
    %77 = vector.load %arg2[%76, %c0_22] : memref<64x128xf32, #tpu.memory_space<vmem>>, vector<1x128xf32>
    %cst_23 = arith.constant 5.65685415 : f32
    %78 = vector.broadcast %cst_23 : f32 to vector<1x128xf32>
    %79 = arith.mulf %77, %78 : vector<1x128xf32>
    %80 = arith.index_cast %c8_i32 : i32 to index
    %c0_24 = arith.constant 0 : index
    %81 = vector.load %arg3[%80, %c0_24] : memref<16x128xf32, #tpu.memory_space<vmem>>, vector<1x128xf32>
    tpu.vector_store %arg3[%80, %c0_24], %79 {strides = array<i32>} : memref<16x128xf32, #tpu.memory_space<vmem>>, vector<1x128xf32>,
    %c9_i32 = arith.constant 9 : i32
    %82 = arith.addi %0, %c9_i32 : i32
    %83 = arith.index_cast %82 : i32 to index
    %84 = memref.load %arg1[%83] : memref<16xi32, #tpu.memory_space<smem>>
    %85 = arith.index_cast %84 : i32 to index
    %c0_25 = arith.constant 0 : index
    %86 = vector.load %arg2[%85, %c0_25] : memref<64x128xf32, #tpu.memory_space<vmem>>, vector<1x128xf32>
    %cst_26 = arith.constant 5.65685415 : f32
    %87 = vector.broadcast %cst_26 : f32 to vector<1x128xf32>
    %88 = arith.mulf %86, %87 : vector<1x128xf32>
    %89 = arith.index_cast %c9_i32 : i32 to index
    %c0_27 = arith.constant 0 : index
    %90 = vector.load %arg3[%89, %c0_27] : memref<16x128xf32, #tpu.memory_space<vmem>>, vector<1x128xf32>
    tpu.vector_store %arg3[%89, %c0_27], %88 {strides = array<i32>} : memref<16x128xf32, #tpu.memory_space<vmem>>, vector<1x128xf32>,
    %c10_i32 = arith.constant 10 : i32
    %91 = arith.addi %0, %c10_i32 : i32
    %92 = arith.index_cast %91 : i32 to index
    %93 = memref.load %arg1[%92] : memref<16xi32, #tpu.memory_space<smem>>
    %94 = arith.index_cast %93 : i32 to index
    %c0_28 = arith.constant 0 : index
    %95 = vector.load %arg2[%94, %c0_28] : memref<64x128xf32, #tpu.memory_space<vmem>>, vector<1x128xf32>
    %cst_29 = arith.constant 5.65685415 : f32
    %96 = vector.broadcast %cst_29 : f32 to vector<1x128xf32>
    %97 = arith.mulf %95, %96 : vector<1x128xf32>
    %98 = arith.index_cast %c10_i32 : i32 to index
    %c0_30 = arith.constant 0 : index
    %99 = vector.load %arg3[%98, %c0_30] : memref<16x128xf32, #tpu.memory_space<vmem>>, vector<1x128xf32>
    tpu.vector_store %arg3[%98, %c0_30], %97 {strides = array<i32>} : memref<16x128xf32, #tpu.memory_space<vmem>>, vector<1x128xf32>,
    %c11_i32 = arith.constant 11 : i32
    %100 = arith.addi %0, %c11_i32 : i32
    %101 = arith.index_cast %100 : i32 to index
    %102 = memref.load %arg1[%101] : memref<16xi32, #tpu.memory_space<smem>>
    %103 = arith.index_cast %102 : i32 to index
    %c0_31 = arith.constant 0 : index
    %104 = vector.load %arg2[%103, %c0_31] : memref<64x128xf32, #tpu.memory_space<vmem>>, vector<1x128xf32>
    %cst_32 = arith.constant 5.65685415 : f32
    %105 = vector.broadcast %cst_32 : f32 to vector<1x128xf32>
    %106 = arith.mulf %104, %105 : vector<1x128xf32>
    %107 = arith.index_cast %c11_i32 : i32 to index
    %c0_33 = arith.constant 0 : index
    %108 = vector.load %arg3[%107, %c0_33] : memref<16x128xf32, #tpu.memory_space<vmem>>, vector<1x128xf32>
    tpu.vector_store %arg3[%107, %c0_33], %106 {strides = array<i32>} : memref<16x128xf32, #tpu.memory_space<vmem>>, vector<1x128xf32>,
    %c12_i32 = arith.constant 12 : i32
    %109 = arith.addi %0, %c12_i32 : i32
    %110 = arith.index_cast %109 : i32 to index
    %111 = memref.load %arg1[%110] : memref<16xi32, #tpu.memory_space<smem>>
    %112 = arith.index_cast %111 : i32 to index
    %c0_34 = arith.constant 0 : index
    %113 = vector.load %arg2[%112, %c0_34] : memref<64x128xf32, #tpu.memory_space<vmem>>, vector<1x128xf32>
    %cst_35 = arith.constant 5.65685415 : f32
    %114 = vector.broadcast %cst_35 : f32 to vector<1x128xf32>
    %115 = arith.mulf %113, %114 : vector<1x128xf32>
    %116 = arith.index_cast %c12_i32 : i32 to index
    %c0_36 = arith.constant 0 : index
    %117 = vector.load %arg3[%116, %c0_36] : memref<16x128xf32, #tpu.memory_space<vmem>>, vector<1x128xf32>
    tpu.vector_store %arg3[%116, %c0_36], %115 {strides = array<i32>} : memref<16x128xf32, #tpu.memory_space<vmem>>, vector<1x128xf32>,
    %c13_i32 = arith.constant 13 : i32
    %118 = arith.addi %0, %c13_i32 : i32
    %119 = arith.index_cast %118 : i32 to index
    %120 = memref.load %arg1[%119] : memref<16xi32, #tpu.memory_space<smem>>
    %121 = arith.index_cast %120 : i32 to index
    %c0_37 = arith.constant 0 : index
    %122 = vector.load %arg2[%121, %c0_37] : memref<64x128xf32, #tpu.memory_space<vmem>>, vector<1x128xf32>
    %cst_38 = arith.constant 5.65685415 : f32
    %123 = vector.broadcast %cst_38 : f32 to vector<1x128xf32>
    %124 = arith.mulf %122, %123 : vector<1x128xf32>
    %125 = arith.index_cast %c13_i32 : i32 to index
    %c0_39 = arith.constant 0 : index
    %126 = vector.load %arg3[%125, %c0_39] : memref<16x128xf32, #tpu.memory_space<vmem>>, vector<1x128xf32>
    tpu.vector_store %arg3[%125, %c0_39], %124 {strides = array<i32>} : memref<16x128xf32, #tpu.memory_space<vmem>>, vector<1x128xf32>,
    %c14_i32 = arith.constant 14 : i32
    %127 = arith.addi %0, %c14_i32 : i32
    %128 = arith.index_cast %127 : i32 to index
    %129 = memref.load %arg1[%128] : memref<16xi32, #tpu.memory_space<smem>>
    %130 = arith.index_cast %129 : i32 to index
    %c0_40 = arith.constant 0 : index
    %131 = vector.load %arg2[%130, %c0_40] : memref<64x128xf32, #tpu.memory_space<vmem>>, vector<1x128xf32>
    %cst_41 = arith.constant 5.65685415 : f32
    %132 = vector.broadcast %cst_41 : f32 to vector<1x128xf32>
    %133 = arith.mulf %131, %132 : vector<1x128xf32>
    %134 = arith.index_cast %c14_i32 : i32 to index
    %c0_42 = arith.constant 0 : index
    %135 = vector.load %arg3[%134, %c0_42] : memref<16x128xf32, #tpu.memory_space<vmem>>, vector<1x128xf32>
    tpu.vector_store %arg3[%134, %c0_42], %133 {strides = array<i32>} : memref<16x128xf32, #tpu.memory_space<vmem>>, vector<1x128xf32>,
    %c15_i32 = arith.constant 15 : i32
    %136 = arith.addi %0, %c15_i32 : i32
    %137 = arith.index_cast %136 : i32 to index
    %138 = memref.load %arg1[%137] : memref<16xi32, #tpu.memory_space<smem>>
    %139 = arith.index_cast %138 : i32 to index
    %c0_43 = arith.constant 0 : index
    %140 = vector.load %arg2[%139, %c0_43] : memref<64x128xf32, #tpu.memory_space<vmem>>, vector<1x128xf32>
    %cst_44 = arith.constant 5.65685415 : f32
    %141 = vector.broadcast %cst_44 : f32 to vector<1x128xf32>
    %142 = arith.mulf %140, %141 : vector<1x128xf32>
    %143 = arith.index_cast %c15_i32 : i32 to index
    %c0_45 = arith.constant 0 : index
    %144 = vector.load %arg3[%143, %c0_45] : memref<16x128xf32, #tpu.memory_space<vmem>>, vector<1x128xf32>
    tpu.vector_store %arg3[%143, %c0_45], %142 {strides = array<i32>} : memref<16x128xf32, #tpu.memory_space<vmem>>, vector<1x128xf32>,
    %c16_i32_46 = arith.constant 16 : i32
    return
  }
  func.func @transform_0(%arg0: i32, %arg1: memref<16xi32, #tpu.memory_space<smem>>) -> (i32, i32) {
    %c0_i32 = arith.constant 0 : i32
    %c0_i32_0 = arith.constant 0 : i32
    %c0_i32_1 = arith.constant 0 : i32
    return %c0_i32, %c0_i32_0 : i32, i32
  }
  func.func @transform_1(%arg0: i32, %arg1: memref<16xi32, #tpu.memory_space<smem>>) -> (i32, i32) {
    %c0_i32 = arith.constant 0 : i32
    %c0_i32_0 = arith.constant 0 : i32
    return %arg0, %c0_i32 : i32, i32
  }
}

</mosaic_0001>

<llo_original>
// kernel: tpu_custom_call.1
$region0: #{tpu_custom_call.1}
  #allocation0 [shape = 'u32[]', space=smem, size = 0x4, offset = 0x4, fixed_abs, tag = 'smem constant byte address 0x4 - core index']
  #allocation1 [shape = 'u32[72,128]{1,0:T(1,128)}', space=vmem, size = 0x9000, scoped, tag = 'internal scratch']
  #allocation2 [shape = 's32[1]{0}', space=sflag, size = 0x4, scoped, tag = 'scoped memory for tpu_custom_call.1']
  #allocation3 [shape = 'u8[512]{0}', space=smem, size = 0x200, scoped, tag = 'prefetched SMEM operand 0']
  %s0 = inlined_call_operand.hbm [shape: s32[16], index: 0, kind: input, shape index: {}]
  %s1 = inlined_call_operand.hbm [shape: f32[64,128], index: 1, kind: input, shape index: {}]
  %s2 = inlined_call_operand.hbm [shape: f32[16,128], index: 2, kind: output, shape index: {}]
  %s3 = sld [smem:[#allocation0]]
  $region18: #{tpu_custom_call.1} parent=0
    _
  %s5 = ssub.s32 1, %s3
  %s6 = scalar_select 0, %s5, %s3
  %s8 = sshll.u32 %s0, 4
  %s9 = int_to_ptr.hbm [resolvable:$true] %s8
  %11 = dma.hbm_to_smem %s9, 16, [#allocation3], [#allocation2]
  %13 = dma.done [#allocation2], 16
  %14 = sfence
  $region1: #{tpu_custom_call.1} parent=0
    #allocation4 [shape = 'u8[32768]{0}', space=vmem, size = 0x8000, scoped, tag = 'input window, operand 1, single buffered']
    #allocation5 [shape = 's32[1]{0}', space=sflag, size = 0x4, scoped, tag = 'scoped memory for tpu_custom_call.1']
    #allocation6 [shape = 's32[1]{0}', space=sflag, size = 0x4, scoped, tag = 'scoped memory for tpu_custom_call.1']
    #allocation7 [shape = 'u8[8192]{0}', space=vmem, size = 0x2000, scoped, tag = 'output window, operand 0, single buffered']
    %15 = vsyncpa [#allocation5], 0
    %16 = vsyncpa [#allocation6], 0
    // Predicated region
    $region2: #{tpu_custom_call.1} parent=1 // pred_check
      _
    $region3: #{tpu_custom_call.1} parent=1 // pred_check_branch
      %18 = sbr.rel (0) target = $region5
    $region4: #{tpu_custom_call.1} parent=1 // pred_region
      %20 = vsyncadd [#allocation5], 0
      %s21 = sshll.u32 %s1, 4
      %s22 = int_to_ptr.hbm [resolvable:$true] %s21
      %s23 = sshll.u32 [#allocation4], 4
      %s24 = int_to_ptr.vmem [resolvable:$true] %s23
      %29 = dma.hbm_to_vmem [thread:$0]  %s22, 1024, %s24, [#allocation5], 128, 128, 8
    $region5: #{tpu_custom_call.1} parent=1 // pred_fallthru
      _
    // Predicated region
    $region6: #{tpu_custom_call.1} parent=1 // pred_check
      _
    $region7: #{tpu_custom_call.1} parent=1 // pred_check_branch
      %31 = sbr.rel (0) target = $region9
    $region8: #{tpu_custom_call.1} parent=1 // pred_region
      %33 = dma.done [#allocation5], 1024
    $region9: #{tpu_custom_call.1} parent=1 // pred_fallthru
      _
    %s34 = smul.u32 0, 16
    %s35 = sld [smem:[#allocation3 + %s34]]
    %s36 = scalar_lea.vmem [#allocation4], %s35
    %v37 = vld [vmem:[%s36] sm:$0x1]
    %v38 = vmul.f32 %v37, 5.656854
    %39 = vst [vmem:[#allocation7] sm:$0x1] %v38
    %s40 = sadd.s32 %s34, 1
    %s41 = sld [smem:[#allocation3 + %s40]]
    %s42 = scalar_lea.vmem [#allocation4], %s41
    %v43 = vld [vmem:[%s42] sm:$0x1]
    %v44 = vmul.f32 %v43, 5.656854
    %45 = vst [vmem:[#allocation7 + $0x1] sm:$0x1] %v44
    %s46 = sadd.s32 %s34, 2
    %s47 = sld [smem:[#allocation3 + %s46]]
    %s48 = scalar_lea.vmem [#allocation4], %s47
    %v49 = vld [vmem:[%s48] sm:$0x1]
    %v50 = vmul.f32 %v49, 5.656854
    %51 = vst [vmem:[#allocation7 + $0x2] sm:$0x1] %v50
    %s52 = sadd.s32 %s34, 3
    %s53 = sld [smem:[#allocation3 + %s52]]
    %s54 = scalar_lea.vmem [#allocation4], %s53
    %v55 = vld [vmem:[%s54] sm:$0x1]
    %v56 = vmul.f32 %v55, 5.656854
    %57 = vst [vmem:[#allocation7 + $0x3] sm:$0x1] %v56
    %s58 = sadd.s32 %s34, 4
    %s59 = sld [smem:[#allocation3 + %s58]]
    %s60 = scalar_lea.vmem [#allocation4], %s59
    %v61 = vld [vmem:[%s60] sm:$0x1]
    %v62 = vmul.f32 %v61, 5.656854
    %63 = vst [vmem:[#allocation7 + $0x4] sm:$0x1] %v62
    %s64 = sadd.s32 %s34, 5
    %s65 = sld [smem:[#allocation3 + %s64]]
    %s66 = scalar_lea.vmem [#allocation4], %s65
    %v67 = vld [vmem:[%s66] sm:$0x1]
    %v68 = vmul.f32 %v67, 5.656854
    %69 = vst [vmem:[#allocation7 + $0x5] sm:$0x1] %v68
    %s70 = sadd.s32 %s34, 6
    %s71 = sld [smem:[#allocation3 + %s70]]
    %s72 = scalar_lea.vmem [#allocation4], %s71
    %v73 = vld [vmem:[%s72] sm:$0x1]
    %v74 = vmul.f32 %v73, 5.656854
    %75 = vst [vmem:[#allocation7 + $0x6] sm:$0x1] %v74
    %s76 = sadd.s32 %s34, 7
    %s77 = sld [smem:[#allocation3 + %s76]]
    %s78 = scalar_lea.vmem [#allocation4], %s77
    %v79 = vld [vmem:[%s78] sm:$0x1]
    %v80 = vmul.f32 %v79, 5.656854
    %81 = vst [vmem:[#allocation7 + $0x7] sm:$0x1] %v80
    %s82 = sadd.s32 %s34, 8
    %s83 = sld [smem:[#allocation3 + %s82]]
    %s84 = scalar_lea.vmem [#allocation4], %s83
    %v85 = vld [vmem:[%s84] sm:$0x1]
    %v86 = vmul.f32 %v85, 5.656854
    %87 = vst [vmem:[#allocation7 + $0x8] sm:$0x1] %v86
    %s88 = sadd.s32 %s34, 9
    %s89 = sld [smem:[#allocation3 + %s88]]
    %s90 = scalar_lea.vmem [#allocation4], %s89
    %v91 = vld [vmem:[%s90] sm:$0x1]
    %v92 = vmul.f32 %v91, 5.656854
    %93 = vst [vmem:[#allocation7 + $0x9] sm:$0x1] %v92
    %s94 = sadd.s32 %s34, 10
    %s95 = sld [smem:[#allocation3 + %s94]]
    %s96 = scalar_lea.vmem [#allocation4], %s95
    %v97 = vld [vmem:[%s96] sm:$0x1]
    %v98 = vmul.f32 %v97, 5.656854
    %99 = vst [vmem:[#allocation7 + $0xa] sm:$0x1] %v98
    %s100 = sadd.s32 %s34, 11
    %s101 = sld [smem:[#allocation3 + %s100]]
    %s102 = scalar_lea.vmem [#allocation4], %s101
    %v103 = vld [vmem:[%s102] sm:$0x1]
    %v104 = vmul.f32 %v103, 5.656854
    %105 = vst [vmem:[#allocation7 + $0xb] sm:$0x1] %v104
    %s106 = sadd.s32 %s34, 12
    %s107 = sld [smem:[#allocation3 + %s106]]
    %s108 = scalar_lea.vmem [#allocation4], %s107
    %v109 = vld [vmem:[%s108] sm:$0x1]
    %v110 = vmul.f32 %v109, 5.656854
    %111 = vst [vmem:[#allocation7 + $0xc] sm:$0x1] %v110
    %s112 = sadd.s32 %s34, 13
    %s113 = sld [smem:[#allocation3 + %s112]]
    %s114 = scalar_lea.vmem [#allocation4], %s113
    %v115 = vld [vmem:[%s114] sm:$0x1]
    %v116 = vmul.f32 %v115, 5.656854
    %117 = vst [vmem:[#allocation7 + $0xd] sm:$0x1] %v116
    %s118 = sadd.s32 %s34, 14
    %s119 = sld [smem:[#allocation3 + %s118]]
    %s120 = scalar_lea.vmem [#allocation4], %s119
    %v121 = vld [vmem:[%s120] sm:$0x1]
    %v122 = vmul.f32 %v121, 5.656854
    %123 = vst [vmem:[#allocation7 + $0xe] sm:$0x1] %v122
    %s124 = sadd.s32 %s34, 15
    %s125 = sld [smem:[#allocation3 + %s124]]
    %s126 = scalar_lea.vmem [#allocation4], %s125
    %v127 = vld [vmem:[%s126] sm:$0x1]
    %v128 = vmul.f32 %v127, 5.656854
    %129 = vst [vmem:[#allocation7 + $0xf] sm:$0x1] %v128
    // Predicated region
    $region10: #{tpu_custom_call.1} parent=1 // pred_check
      _
    $region11: #{tpu_custom_call.1} parent=1 // pred_check_branch
      %131 = sbr.rel (0) target = $region13
    $region12: #{tpu_custom_call.1} parent=1 // pred_region
      %133 = vsyncadd [#allocation6], 0
      %s134 = sshll.u32 [#allocation7], 4
      %s135 = int_to_ptr.vmem [resolvable:$true] %s134
      %s136 = sshll.u32 %s2, 4
      %s137 = int_to_ptr.hbm [resolvable:$true] %s136
      %142 = dma.vmem_to_hbm [thread:$0]  %s135, 256, %s137, [#allocation6], 128, 128, 8
    $region13: #{tpu_custom_call.1} parent=1 // pred_fallthru
      _
    // Predicated region
    $region14: #{tpu_custom_call.1} parent=1 // pred_check
      _
    $region15: #{tpu_custom_call.1} parent=1 // pred_check_branch
      %144 = sbr.rel (0) target = $region17
    $region16: #{tpu_custom_call.1} parent=1 // pred_region
      %146 = dma.done [#allocation6], 256
    $region17: #{tpu_custom_call.1} parent=1 // pred_fallthru
      _
    %147 = vsyncpa [#allocation5], 1
    %148 = vsyncpa [#allocation6], 1

</llo_original>
